<compile_context>
chip_gen: v7x
topology: tpu7x:2x2x1
jax: 0.10.0
libtpu: 0.0.40
codegen_flags: <defaults>
</compile_context>

<pallas_src>
import functools

import jax
import jax.numpy as jnp
from jax.experimental import pallas as pl
from jax.experimental.pallas import tpu as pltpu


# --------------------------------------------------------------------------
# small helpers
# --------------------------------------------------------------------------
def _round_up(x, m):
    return (x + m - 1) // m * m


def _bf16_round(a):
    return a.astype(jnp.bfloat16).astype(jnp.float32)


def _row_tiling(b):
    """Row padding + tile for the fused MLP: tile is a multiple of 8 sublanes,
    divides the padded row count, and the parallel grid axis has >= 2 steps."""
    bp = _round_up(max(b, 16), 16)
    tm = 8
    for cand in (256, 128, 64, 32, 16, 8):
        if cand <= bp // 2 and bp % cand == 0:
            tm = cand
            break
    return bp, tm, bp // tm


def _batch_tiling(b):
    """Samples per grid step for the fused CNN kernel; >= 2 grid steps."""
    bs = 1 if b < 4 else min(4, b // 2)
    grid = -(-b // bs)
    return bs, grid


def _const_spec(shape):
    n = len(shape)
    return pl.BlockSpec(tuple(shape), lambda i, _n=n: (0,) * _n)


# --------------------------------------------------------------------------
# Pallas kernels
# --------------------------------------------------------------------------
def _mlp_kernel(*refs, n_layers):
    """Fused MLP: bf16 x bf16 -> f32 MXU, bias+ReLU epilogue in f32."""
    x_ref, o_ref = refs[0], refs[-1]
    h = x_ref[...]                                   # bf16 (tm, K)
    for l in range(n_layers):
        w_ref = refs[1 + 2 * l]
        b_ref = refs[2 + 2 * l]
        acc = jnp.dot(h, w_ref[...], preferred_element_type=jnp.float32)
        acc = acc + b_ref[...]                       # f32 bias
        if l < n_layers - 1:
            h = jnp.maximum(acc, 0.0).astype(w_ref.dtype)   # bf16 for next pass
        else:
            h = acc                                  # final layer stays f32
    o_ref[...] = h.astype(o_ref.dtype)


def _cnn_fused_kernel(x_ref, w1_ref, b1_ref, w2_ref, b2_ref, w3_ref, b3_ref,
                      fw1_ref, fb1_ref, fw2_ref, fb2_ref, o_ref,
                      *, bs, yn, oh2, oh3):
    """Whole DQN CNN (conv1..conv3 + 2-layer head) on one batch block.

    x_ref  : (bs, 2, 2, Hq, Wq, 16*C)  conv1 input, stride-folded and grouped
                                       by row/col parity (done outside, free).
    w1_ref : (2, 2, 16*C, 32)          conv1 taps, K lanes ordered (uy,ux,cin)
    w2_ref : (2, 2, 2, 2, 32, 64)      conv2 [qy, qx, kyb, kxb, cin, oc]
    w3_ref : (3, 3, 64, 64)            conv3 HWIO
    fw1_ref: (o3, o3, 64, 512)         fc1 folded over conv3 spatial positions
    fw2_ref: (512, out_p)              out_p = round_up(out_size, 128)
    o_ref  : (1, bs, out_p) f32
    """
    f32 = jnp.float32

    # ---- conv1: 8x8 stride 4, computed per output-parity class so that the
    #      result is produced directly in conv2's stride-2 grouping ----------
    h1 = []                                    # 4 parity blocks (bs, yn, yn, 32)
    for py in range(2):
        for px in range(2):
            acc = jnp.zeros((bs * yn * yn, 32), f32)
            for kyb in range(2):
                ty = py + kyb
                ry, y0 = ty % 2, ty // 2
                for kxb in range(2):
                    tx = px + kxb
                    rx, x0 = tx % 2, tx // 2
                    lhs = x_ref[:, ry, rx, y0:y0 + yn, x0:x0 + yn, :]
                    lhs = lhs.reshape(bs * yn * yn, lhs.shape[-1])
                    acc = acc + jnp.dot(lhs, w1_ref[kyb, kxb],
                                        preferred_element_type=f32)
            a = jnp.maximum(acc + b1_ref[...], 0.0).astype(jnp.bfloat16)
            h1.append(a.reshape(bs, yn, yn, 32))

    # ---- conv2: 4x4 stride 2; parity block p == stride sub-position --------
    acc2 = jnp.zeros((bs * oh2 * oh2, 64), f32)
    for qy in range(2):
        for qx in range(2):
            hp = h1[qy * 2 + qx]
            for kyb in range(2):
                for kxb in range(2):
                    lhs = hp[:, kyb:kyb + oh2, kxb:kxb + oh2, :]
                    lhs = lhs.reshape(bs * oh2 * oh2, 32)
                    acc2 = acc2 + jnp.dot(lhs, w2_ref[qy, qx, kyb, kxb],
                                          preferred_element_type=f32)
    h2 = jnp.maximum(acc2 + b2_ref[...], 0.0).astype(jnp.bfloat16)
    h2 = h2.reshape(bs, oh2, oh2, 64)

    # ---- conv3: 3x3 stride 1 ------------------------------------------------
    acc3 = jnp.zeros((bs * oh3 * oh3, 64), f32)
    for ky in range(3):
        for kx in range(3):
            lhs = h2[:, ky:ky + oh3, kx:kx + oh3, :].reshape(bs * oh3 * oh3, 64)
            acc3 = acc3 + jnp.dot(lhs, w3_ref[ky, kx], preferred_element_type=f32)
    h3 = jnp.maximum(acc3 + b3_ref[...], 0.0).astype(jnp.bfloat16)

    # ---- head MLP: fc1 folded over conv3 spatial positions (no flatten) ----
    acc4 = jnp.zeros((bs, fw1_ref.shape[-1]), f32)
    if oh3 == 1:
        acc4 = acc4 + jnp.dot(h3, fw1_ref[0, 0], preferred_element_type=f32)
    else:
        h3r = h3.reshape(bs, oh3, oh3, 64)
        for y in range(oh3):
            for x in range(oh3):
                lhs = h3r[:, y:y + 1, x:x + 1, :].reshape(bs, 64)
                acc4 = acc4 + jnp.dot(lhs, fw1_ref[y, x],
                                      preferred_element_type=f32)
    h4 = jnp.maximum(acc4 + fb1_ref[...], 0.0).astype(jnp.bfloat16)

    out = jnp.dot(h4, fw2_ref[...], preferred_element_type=f32) + fb2_ref[...]
    o_ref[0] = out.astype(o_ref.dtype)


# --------------------------------------------------------------------------
# Pallas wrappers
# --------------------------------------------------------------------------
def pallas_mlp(x, layers):
    """Fused bf16 MLP (ReLU between layers, last layer linear), f32 output.

    x       : (B, K) bf16 -- rows are zero-padded internally (exact math)
    layers  : list of (w, b) with w (K, N) bf16 and b (1, N) f32
    """
    B, K = x.shape
    bp, tm, grid = _row_tiling(B)
    if bp != B:
        x = jnp.pad(x, ((0, bp - B), (0, 0)))
    n_out = layers[-1][0].shape[1]

    in_specs = [pl.BlockSpec((tm, K), lambda i: (i, 0))]
    args = [x]
    flops = 0
    nbytes = int(x.size) * x.dtype.itemsize + bp * n_out * 4
    for w, b in layers:
        kk, nn = w.shape
        in_specs.append(pl.BlockSpec((kk, nn), lambda i: (0, 0)))   # resident
        in_specs.append(pl.BlockSpec((1, nn), lambda i: (0, 0)))    # resident
        args += [w, b]
        flops += 2 * bp * kk * nn
        nbytes += int(w.size) * w.dtype.itemsize + int(b.size) * b.dtype.itemsize

    out = pl.pallas_call(
        functools.partial(_mlp_kernel, n_layers=len(layers)),
        out_shape=jax.ShapeDtypeStruct((bp, n_out), jnp.float32),
        grid=(grid,),
        in_specs=in_specs,
        out_specs=pl.BlockSpec((tm, n_out), lambda i: (i, 0)),
        compiler_params=pltpu.CompilerParams(dimension_semantics=("parallel",)),
        cost_estimate=pl.CostEstimate(flops=int(flops), transcendentals=0,
                                      bytes_accessed=int(nbytes)),
    )(*args)
    return out[:B]


def _fold_conv1_input(x):
    """NCHW -> conv1 stride-folded, parity-grouped layout (B,2,2,Hq,Wq,16*C).

    xpp[b, ry, rx, iy, ix, (uy*4+ux)*C + c] = x[b, c, (2*iy+ry)*4+uy, (2*ix+rx)*4+ux]
    This single XLA transpose replaces the NCHW->NHWC entry transpose.
    """
    B, C, H, W = x.shape
    s = 4
    hq = (H // s + 1) // 2
    hpad = hq * 2 * s
    xp = jnp.pad(x, ((0, 0), (0, 0), (0, hpad - H), (0, hpad - W)))
    xp = xp.reshape(B, C, hq, 2, s, hq, 2, s)
    xp = xp.transpose(0, 3, 6, 2, 5, 4, 7, 1)   # (B, ry, rx, iy, ix, uy, ux, C)
    return xp.reshape(B, 2, 2, hq, hq, s * s * C).astype(jnp.bfloat16)


# --------------------------------------------------------------------------
# jitted forward passes
# --------------------------------------------------------------------------
def _fc_forward(params, x, *, out_size):
    xb = x.astype(jnp.bfloat16)
    out = pallas_mlp(xb, [(params["w1"], params["b1"]),
                          (params["w2"], params["b2"]),
                          (params["w3"], params["b3"])])
    return out[:, :out_size]                   # drop zero-padded lanes


def _cnn_forward(params, x, *, out_size):
    B, C, H, W = x.shape
    o1 = (H - 8) // 4 + 1
    o2 = (o1 - 4) // 2 + 1
    o3 = o2 - 2
    yn = o1 // 2
    hq = (H // 4 + 1) // 2
    out_p = params["fw2"].shape[1]

    xpp = _fold_conv1_input(x)                        # (B,2,2,hq,hq,16*C) bf16
    bs, grid = _batch_tiling(B)
    bp = bs * grid
    if bp != B:
        xpp = jnp.pad(xpp, ((0, bp - B),) + ((0, 0),) * 5)

    flops = 2 * bp * (o1 * o1 * 64 * C * 32 + o2 * o2 * 512 * 64
                      + o3 * o3 * 576 * 64 + o3 * o3 * 64 * 512 + 512 * out_p)
    nbytes = int(xpp.size) * 2 + bp * out_p * 4
    for v in params.values():
        nbytes += int(v.size) * v.dtype.itemsize

    out = pl.pallas_call(
        functools.partial(_cnn_fused_kernel, bs=bs, yn=yn, oh2=o2, oh3=o3),
        out_shape=jax.ShapeDtypeStruct((grid, bs, out_p), jnp.float32),
        grid=(grid,),
        in_specs=[
            pl.BlockSpec((bs, 2, 2, hq, hq, 16 * C),
                         lambda i: (i, 0, 0, 0, 0, 0)),
            _const_spec(params["cw1"].shape),
            _const_spec(params["cb1"].shape),
            _const_spec(params["cw2"].shape),
            _const_spec(params["cb2"].shape),
            _const_spec(params["cw3"].shape),
            _const_spec(params["cb3"].shape),
            _const_spec(params["fw1"].shape),
            _const_spec(params["fb1"].shape),
            _const_spec(params["fw2"].shape),
            _const_spec(params["fb2"].shape),
        ],
        out_specs=pl.BlockSpec((1, bs, out_p), lambda i: (i, 0, 0)),
        compiler_params=pltpu.CompilerParams(dimension_semantics=("parallel",)),
        cost_estimate=pl.CostEstimate(flops=int(flops), transcendentals=0,
                                      bytes_accessed=int(nbytes)),
    )(xpp, params["cw1"], params["cb1"], params["cw2"], params["cb2"],
      params["cw3"], params["cb3"], params["fw1"], params["fb1"],
      params["fw2"], params["fb2"])
    return out.reshape(bp, out_p)[:B, :out_size]


# --------------------------------------------------------------------------
# parameter init (PyTorch-default-style uniform bounds) + packing
# --------------------------------------------------------------------------
def _init_linear(key, fan_in, fan_out):
    kw_, kb_ = jax.random.split(key)
    lim = 1.0 / (fan_in ** 0.5)
    w = jax.random.uniform(kw_, (fan_in, fan_out), jnp.float32, -lim, lim)
    b = jax.random.uniform(kb_, (fan_out,), jnp.float32, -lim, lim)
    return w, b


def _init_conv(key, oc, c, kh, kw_):
    kk, kb_ = jax.random.split(key)
    fan_in = c * kh * kw_
    lim = 1.0 / (fan_in ** 0.5)
    w = jax.random.uniform(kk, (oc, c, kh, kw_), jnp.float32, -lim, lim)  # OIHW
    b = jax.random.uniform(kb_, (oc,), jnp.float32, -lim, lim)
    return w, b


def _pad_w(w, k_pad, n_pad):
    K, N = w.shape
    wp = jnp.zeros((k_pad, n_pad), jnp.float32).at[:K, :N].set(w)
    return wp.astype(jnp.bfloat16)


def _pad_b(b, n_pad):
    N = b.shape[0]
    return jnp.zeros((1, n_pad), jnp.float32).at[0, :N].set(b)


def _conv1_w_fold(w):
    """OIHW (32, C, 8, 8) -> (2, 2, 16*C, 32): taps (kyb,kxb), K lanes (uy,ux,c)."""
    oc, c, kh, kw_ = w.shape
    s = 4
    wt = jnp.transpose(w, (2, 3, 1, 0))                 # (kh, kw, C, O)
    wt = wt.reshape(kh // s, s, kw_ // s, s, c, oc)     # (kyb, uy, kxb, ux, C, O)
    wt = wt.transpose(0, 2, 1, 3, 4, 5)                 # (kyb, kxb, uy, ux, C, O)
    return wt.reshape(kh // s, kw_ // s, s * s * c, oc).astype(jnp.bfloat16)


def _conv2_w_fold(w):
    """OIHW (64, 32, 4, 4) -> (2, 2, 2, 2, 32, 64): [qy, qx, kyb, kxb, cin, oc]."""
    oc, c, kh, kw_ = w.shape
    s = 2
    wt = jnp.transpose(w, (2, 3, 1, 0))                 # (kh, kw, C, O)
    wt = wt.reshape(kh // s, s, kw_ // s, s, c, oc)     # (kyb, qy, kxb, qx, C, O)
    return wt.transpose(1, 3, 0, 2, 4, 5).astype(jnp.bfloat16)


def _conv3_w_hwio(w):
    """OIHW (64, 64, 3, 3) -> HWIO (3, 3, 64, 64)."""
    return jnp.transpose(w, (2, 3, 1, 0)).astype(jnp.bfloat16)


# --------------------------------------------------------------------------
# DqnNetwork equivalent
# --------------------------------------------------------------------------
class Config:
    def __init__(self, nn_type):
        self.nn_type = nn_type


class DqnNetworkPallas:
    """Pallas port of DqnNetwork: dispatches to the FC or CNN sub-network."""

    def __init__(self, in_size, out_size, config, key, img_hw=36):
        self.nn_type = config.nn_type
        self.out_size = out_size
        out_p = _round_up(out_size, 128)

        if self.nn_type == "FC":
            k1, k2, k3 = jax.random.split(key, 3)
            w1, b1 = _init_linear(k1, in_size, 64)
            w2, b2 = _init_linear(k2, 64, 64)
            w3, b3 = _init_linear(k3, 64, out_size)
            # hidden 64 and out_size are zero-padded to 128 lanes (exact math).
            self.params = dict(
                w1=_pad_w(w1, in_size, 128), b1=_pad_b(b1, 128),
                w2=_pad_w(w2, 128, 128),     b2=_pad_b(b2, 128),
                w3=_pad_w(w3, 128, out_p),   b3=_pad_b(b3, out_p),
            )
            self.ref_params = dict(
                w1=_bf16_round(w1), b1=b1,
                w2=_bf16_round(w2), b2=b2,
                w3=_bf16_round(w3), b3=b3,
            )
            self._forward = jax.jit(
                functools.partial(_fc_forward, out_size=out_size))

        elif self.nn_type == "CNN":
            k1, k2, k3, k4, k5 = jax.random.split(key, 5)
            cw1, cb1 = _init_conv(k1, 32, in_size, 8, 8)
            cw2, cb2 = _init_conv(k2, 64, 32, 4, 4)
            cw3, cb3 = _init_conv(k3, 64, 64, 3, 3)
            o1 = (img_hw - 8) // 4 + 1
            o2 = (o1 - 4) // 2 + 1
            o3 = o2 - 2
            # TODO(synk): canonical DQN shapes (84/36px) always satisfy these.
            assert img_hw % 4 == 0 and o1 % 2 == 0 and o3 >= 1
            flat = 64 * o3 * o3          # NHWC flatten order (weights are ours)
            fw1, fb1 = _init_linear(k4, flat, 512)
            fw2, fb2 = _init_linear(k5, 512, out_size)
            self.params = dict(
                cw1=_conv1_w_fold(cw1), cb1=cb1.reshape(1, -1),
                cw2=_conv2_w_fold(cw2), cb2=cb2.reshape(1, -1),
                cw3=_conv3_w_hwio(cw3), cb3=cb3.reshape(1, -1),
                fw1=fw1.reshape(o3, o3, 64, 512).astype(jnp.bfloat16),
                fb1=fb1.reshape(1, -1),
                fw2=_pad_w(fw2, 512, out_p), fb2=_pad_b(fb2, out_p),
            )
            self.ref_params = dict(
                cw1=_bf16_round(jnp.transpose(cw1, (2, 3, 1, 0))), cb1=cb1,
                cw2=_bf16_round(jnp.transpose(cw2, (2, 3, 1, 0))), cb2=cb2,
                cw3=_bf16_round(jnp.transpose(cw3, (2, 3, 1, 0))), cb3=cb3,
                fw1=_bf16_round(fw1), fb1=fb1,
                fw2=_bf16_round(fw2), fb2=fb2,
            )
            self._forward = jax.jit(
                functools.partial(_cnn_forward, out_size=out_size))
        else:
            raise ValueError(config.nn_type)

    def __call__(self, x):
        return self._forward(self.params, x)


# --------------------------------------------------------------------------
# Pure-JAX references (bf16-rounded weights/activations to mirror the kernels)
# --------------------------------------------------------------------------
def _fc_ref(x, rp):
    xb = _bf16_round(x)
    h = _bf16_round(jax.nn.relu(xb @ rp["w1"] + rp["b1"]))
    h = _bf16_round(jax.nn.relu(h @ rp["w2"] + rp["b2"]))
    return h @ rp["w3"] + rp["b3"]


def _cnn_ref(x, rp):
    xb = _bf16_round(jnp.transpose(x, (0, 2, 3, 1)))

    def conv(h, w_hwio, b, s):
        y = jax.lax.conv_general_dilated(
            h, w_hwio, (s, s), "VALID",
            dimension_numbers=("NHWC", "HWIO", "NHWC"))
        return _bf16_round(jax.nn.relu(y + b.reshape(1, 1, 1, -1)))

    h = conv(xb, rp["cw1"], rp["cb1"], 4)
    h = conv(h, rp["cw2"], rp["cb2"], 2)
    h = conv(h, rp["cw3"], rp["cb3"], 1)
    h = h.reshape(h.shape[0], -1)
    h = _bf16_round(jax.nn.relu(h @ rp["fw1"] + rp["fb1"]))
    return h @ rp["fw2"] + rp["fb2"]


if __name__ == "__main__":
    key = jax.random.PRNGKey(0)

    # ---- FC variant: batch=2, in_size=16, out_size=4 ----------------------
    fc_net = DqnNetworkPallas(16, 4, Config("FC"), key)
    x_fc = jax.random.normal(jax.random.PRNGKey(1), (2, 16), jnp.float32)
    y_fc = jax.block_until_ready(fc_net(x_fc))
    ref_fc = _fc_ref(x_fc, fc_net.ref_params)
    assert y_fc.shape == (2, 4)
    assert jnp.allclose(y_fc, ref_fc, atol=2e-2, rtol=2e-2), (
        float(jnp.max(jnp.abs(y_fc - ref_fc))))

    # ---- CNN variant: batch=2, 4 channels, 36x36 image, 4 actions ---------
    cnn_net = DqnNetworkPallas(4, 4, Config("CNN"), key, img_hw=36)
    x_cnn = jax.random.normal(jax.random.PRNGKey(2), (2, 4, 36, 36), jnp.float32)
    y_cnn = jax.block_until_ready(cnn_net(x_cnn))
    ref_cnn = _cnn_ref(x_cnn, cnn_net.ref_params)
    assert y_cnn.shape == (2, 4)
    assert jnp.allclose(y_cnn, ref_cnn, atol=5e-2, rtol=5e-2), (
        float(jnp.max(jnp.abs(y_cnn - ref_cnn))))

    print("KERNEL_OK")
</pallas_src>

<mosaic_0001>
module attributes {stable_mosaic.version = 11 : i64} {
  func.func @_mlp_kernel(%arg0: i32, %arg1: memref<8x16xbf16, #tpu.memory_space<vmem>>, %arg2: memref<16x128xbf16, #tpu.memory_space<vmem>>, %arg3: memref<1x128xf32, #tpu.memory_space<vmem>>, %arg4: memref<128x128xbf16, #tpu.memory_space<vmem>>, %arg5: memref<1x128xf32, #tpu.memory_space<vmem>>, %arg6: memref<128x128xbf16, #tpu.memory_space<vmem>>, %arg7: memref<1x128xf32, #tpu.memory_space<vmem>>, %arg8: memref<8x128xf32, #tpu.memory_space<vmem>>) attributes {dimension_semantics = [#tpu.dimension_semantics<parallel>], iteration_bounds = array<i64: 2>, scalar_prefetch = 0 : i64, scratch_operands = 0 : i64, tpu.core_type = #tpu.core_type<tc>, window_params = [{transform_indices = @transform_0, window_bounds = array<i64: 8, 16>}, {pipeline_mode = #tpu.pipeline_mode<synchronous>, transform_indices = @transform_1, window_bounds = array<i64: 16, 128>}, {pipeline_mode = #tpu.pipeline_mode<synchronous>, transform_indices = @transform_2, window_bounds = array<i64: 1, 128>}, {pipeline_mode = #tpu.pipeline_mode<synchronous>, transform_indices = @transform_3, window_bounds = array<i64: 128, 128>}, {pipeline_mode = #tpu.pipeline_mode<synchronous>, transform_indices = @transform_4, window_bounds = array<i64: 1, 128>}, {pipeline_mode = #tpu.pipeline_mode<synchronous>, transform_indices = @transform_5, window_bounds = array<i64: 128, 128>}, {pipeline_mode = #tpu.pipeline_mode<synchronous>, transform_indices = @transform_6, window_bounds = array<i64: 1, 128>}, {transform_indices = @transform_7, window_bounds = array<i64: 8, 128>}]} {
    %c0 = arith.constant 0 : index
    %c0_0 = arith.constant 0 : index
    %0 = vector.load %arg1[%c0, %c0_0] : memref<8x16xbf16, #tpu.memory_space<vmem>>, vector<8x16xbf16>
    %c0_1 = arith.constant 0 : index
    %c0_2 = arith.constant 0 : index
    %1 = vector.load %arg2[%c0_1, %c0_2] : memref<16x128xbf16, #tpu.memory_space<vmem>>, vector<16x128xbf16>
    %cst = arith.constant dense<0.000000e+00> : vector<8x128xf32>
    %2 = tpu.matmul %0, %1, %cst {dimension_numbers = #tpu.dot_dimension_numbers<[1], [0], [0], [1], [0, 0, 1, 1], [], []>} : vector<8x16xbf16>, vector<16x128xbf16>, vector<8x128xf32> -> vector<8x128xf32>
    %c0_3 = arith.constant 0 : index
    %c0_4 = arith.constant 0 : index
    %3 = vector.load %arg3[%c0_3, %c0_4] : memref<1x128xf32, #tpu.memory_space<vmem>>, vector<1x128xf32>
    %4 = vector.broadcast %3 : vector<1x128xf32> to vector<8x128xf32>
    %5 = arith.addf %2, %4 : vector<8x128xf32>
    %cst_5 = arith.constant 0.000000e+00 : f32
    %6 = vector.broadcast %cst_5 : f32 to vector<8x128xf32>
    %7 = arith.maximumf %5, %6 : vector<8x128xf32>
    %8 = arith.truncf %7 : vector<8x128xf32> to vector<8x128xbf16>
    %c0_6 = arith.constant 0 : index
    %c0_7 = arith.constant 0 : index
    %9 = vector.load %arg4[%c0_6, %c0_7] : memref<128x128xbf16, #tpu.memory_space<vmem>>, vector<128x128xbf16>
    %cst_8 = arith.constant dense<0.000000e+00> : vector<8x128xf32>
    %10 = tpu.matmul %8, %9, %cst_8 {dimension_numbers = #tpu.dot_dimension_numbers<[1], [0], [0], [1], [0, 0, 1, 1], [], []>} : vector<8x128xbf16>, vector<128x128xbf16>, vector<8x128xf32> -> vector<8x128xf32>
    %c0_9 = arith.constant 0 : index
    %c0_10 = arith.constant 0 : index
    %11 = vector.load %arg5[%c0_9, %c0_10] : memref<1x128xf32, #tpu.memory_space<vmem>>, vector<1x128xf32>
    %12 = vector.broadcast %11 : vector<1x128xf32> to vector<8x128xf32>
    %13 = arith.addf %10, %12 : vector<8x128xf32>
    %cst_11 = arith.constant 0.000000e+00 : f32
    %14 = vector.broadcast %cst_11 : f32 to vector<8x128xf32>
    %15 = arith.maximumf %13, %14 : vector<8x128xf32>
    %16 = arith.truncf %15 : vector<8x128xf32> to vector<8x128xbf16>
    %c0_12 = arith.constant 0 : index
    %c0_13 = arith.constant 0 : index
    %17 = vector.load %arg6[%c0_12, %c0_13] : memref<128x128xbf16, #tpu.memory_space<vmem>>, vector<128x128xbf16>
    %cst_14 = arith.constant dense<0.000000e+00> : vector<8x128xf32>
    %18 = tpu.matmul %16, %17, %cst_14 {dimension_numbers = #tpu.dot_dimension_numbers<[1], [0], [0], [1], [0, 0, 1, 1], [], []>} : vector<8x128xbf16>, vector<128x128xbf16>, vector<8x128xf32> -> vector<8x128xf32>
    %c0_15 = arith.constant 0 : index
    %c0_16 = arith.constant 0 : index
    %19 = vector.load %arg7[%c0_15, %c0_16] : memref<1x128xf32, #tpu.memory_space<vmem>>, vector<1x128xf32>
    %20 = vector.broadcast %19 : vector<1x128xf32> to vector<8x128xf32>
    %21 = arith.addf %18, %20 : vector<8x128xf32>
    %c0_17 = arith.constant 0 : index
    %c0_18 = arith.constant 0 : index
    %22 = vector.load %arg8[%c0_17, %c0_18] : memref<8x128xf32, #tpu.memory_space<vmem>>, vector<8x128xf32>
    tpu.vector_store %arg8[%c0_17, %c0_18], %21 {strides = array<i32>} : memref<8x128xf32, #tpu.memory_space<vmem>>, vector<8x128xf32>,
    return
  }
  func.func @transform_0(%arg0: i32) -> (i32, i32) {
    %c0_i32 = arith.constant 0 : i32
    %c0_i32_0 = arith.constant 0 : i32
    return %arg0, %c0_i32 : i32, i32
  }
  func.func @transform_1(%arg0: i32) -> (i32, i32) {
    %c0_i32 = arith.constant 0 : i32
    %c0_i32_0 = arith.constant 0 : i32
    %c0_i32_1 = arith.constant 0 : i32
    return %c0_i32, %c0_i32_0 : i32, i32
  }
  func.func @transform_2(%arg0: i32) -> (i32, i32) {
    %c0_i32 = arith.constant 0 : i32
    %c0_i32_0 = arith.constant 0 : i32
    %c0_i32_1 = arith.constant 0 : i32
    return %c0_i32, %c0_i32_0 : i32, i32
  }
  func.func @transform_3(%arg0: i32) -> (i32, i32) {
    %c0_i32 = arith.constant 0 : i32
    %c0_i32_0 = arith.constant 0 : i32
    %c0_i32_1 = arith.constant 0 : i32
    return %c0_i32, %c0_i32_0 : i32, i32
  }
  func.func @transform_4(%arg0: i32) -> (i32, i32) {
    %c0_i32 = arith.constant 0 : i32
    %c0_i32_0 = arith.constant 0 : i32
    %c0_i32_1 = arith.constant 0 : i32
    return %c0_i32, %c0_i32_0 : i32, i32
  }
  func.func @transform_5(%arg0: i32) -> (i32, i32) {
    %c0_i32 = arith.constant 0 : i32
    %c0_i32_0 = arith.constant 0 : i32
    %c0_i32_1 = arith.constant 0 : i32
    return %c0_i32, %c0_i32_0 : i32, i32
  }
  func.func @transform_6(%arg0: i32) -> (i32, i32) {
    %c0_i32 = arith.constant 0 : i32
    %c0_i32_0 = arith.constant 0 : i32
    %c0_i32_1 = arith.constant 0 : i32
    return %c0_i32, %c0_i32_0 : i32, i32
  }
  func.func @transform_7(%arg0: i32) -> (i32, i32) {
    %c0_i32 = arith.constant 0 : i32
    %c0_i32_0 = arith.constant 0 : i32
    return %arg0, %c0_i32 : i32, i32
  }
}

</mosaic_0001>

<llo_original>
// kernel: _fc_forward.1
$region0: #{_fc_forward.1}
  #allocation0 [shape = 'u32[]', space=smem, size = 0x4, offset = 0x4, fixed_abs, tag = 'smem constant byte address 0x4 - core index']
  #allocation1 [shape = 'u32[144,128]{1,0:T(1,128)}', space=vmem, size = 0x12000, scoped, tag = 'internal scratch']
  %s0 = inlined_call_operand.vmem [shape: bf16[16,16], index: 0, kind: input, shape index: {}]
  %s1 = inlined_call_operand.vmem [shape: bf16[16,128], index: 1, kind: input, shape index: {}]
  %s2 = inlined_call_operand.vmem [shape: f32[1,128], index: 2, kind: input, shape index: {}]
  %s3 = inlined_call_operand.hbm [shape: bf16[128,128], index: 3, kind: input, shape index: {}]
  %s4 = inlined_call_operand.vmem [shape: f32[1,128], index: 4, kind: input, shape index: {}]
  %s5 = inlined_call_operand.hbm [shape: bf16[128,128], index: 5, kind: input, shape index: {}]
  %s6 = inlined_call_operand.vmem [shape: f32[1,128], index: 6, kind: input, shape index: {}]
  %s7 = inlined_call_operand.vmem [shape: f32[16,128], index: 7, kind: output, shape index: {}]
  %s8 = sld [smem:[#allocation0]]
  $region69: #{_fc_forward.1} parent=0
    _
  %s10 = ssub.s32 1, %s8
  %s11 = scalar_select 0, %s10, %s8
  $region1: #{_fc_forward.1} parent=0
    #allocation2 [shape = 'u8[32768]{0}', space=vmem, size = 0x8000, scoped, tag = 'input window, operand 3, single buffered']
    #allocation3 [shape = 's32[2]{0}', space=sflag, size = 0x8, scoped, tag = 'scoped memory for _fc_forward.1']
    #allocation4 [shape = 'u8[32768]{0}', space=vmem, size = 0x8000, scoped, tag = 'input window, operand 5, single buffered']
    #allocation5 [shape = 's32[1]{0}', space=sflag, size = 0x4, scoped, tag = 'scoped memory for _fc_forward.1']
    %12 = vsyncpa [#allocation3], 0
    %13 = vsyncpa [#allocation5], 0
    loop: start=0, step=1, limit=4
    $region2: #{_fc_forward.1} parent=1 // loop_pre_header
      _
    $region3: #{_fc_forward.1} parent=1 // loop_header
      %s15 = sphi 0, %s19
      %p16 = scmp.ge.s32.totalorder %s15, 4
      %s25 = sphi 0, %s27
      %s28 = sphi 0, %s25
      %s29 = sphi 0, %s28
      %s45 = sphi 0, %s29
      %s49 = sphi 0, %s49
      %s51 = sphi 0, %s49
      %s52 = sphi 0, %s51
      %s66 = sphi 0, %s52
      %s70 = sphi 0, %s70
      %s72 = sphi 0, %s70
      %s73 = sphi 0, %s72
      %s87 = sphi 0, %s73
      %s91 = sphi 0, %s91
      %s93 = sphi 0, %s91
      %s94 = sphi 0, %s93
      %s108 = sphi 0, %s94
      %s112 = sphi 0, %s112
      %s114 = sphi 0, %s112
      %s115 = sphi 0, %s114
      %s129 = sphi 0, %s115
      %s133 = sphi 0, %s133
      %s135 = sphi 0, %s133
      %s136 = sphi 0, %s135
      %s150 = sphi 0, %s136
      %s154 = sphi 0, %s154
      %s156 = sphi 0, %s154
      %s157 = sphi 0, %s156
      %s171 = sphi 0, %s157
      %s177 = sphi 0, %s179
      %s180 = sphi 0, %s177
      %s181 = sphi 0, %s180
      %s197 = sphi 0, %s181
    $region4: #{_fc_forward.1} parent=1 // loop_header_branch
      %18 = sbr.rel (%p16) target = $region8
    $region5: #{_fc_forward.1} parent=1 // loop_body
      %s20 = ssub.s32 %s15, 1
      %s21 = ssub.s32 %s15, 2
      %s22 = sadd.s32 %s15, 1
      %s23 = ssub.s32 %s15, %s22
      %p24 = scmp.eq.s32.totalorder %s23, 0
      %s26 = sadd.s32 %s25, 1
      %s27 = scalar_select %p24, %s25, %s26
      %p30 = pneg %p24
      %p31 = scmp.eq.s32.totalorder %s15, 1
      %p32 = por %p30, %p31
      %p33 = scmp.ne.s32.totalorder %s25, %s28
      %p34 = scmp.eq.s32.totalorder %s15, 0
      %p35 = por %p33, %p34
      %p36 = scmp.ne.s32.totalorder %s25, %s28
      %p37 = scmp.eq.s32.totalorder %s20, 1
      %p38 = por %p36, %p37
      %p39 = scmp.ne.s32.totalorder %s28, %s29
      %p40 = scmp.eq.s32.totalorder %s20, 0
      %p41 = por %p39, %p40
      %p42 = scmp.ne.s32.totalorder %s28, %s29
      %p43 = scmp.eq.s32.totalorder %s21, 1
      %p44 = por %p42, %p43
      %p46 = scmp.ne.s32.totalorder %s29, %s45
      %p47 = scmp.eq.s32.totalorder %s21, 0
      %p48 = por %p46, %p47
      %s50 = sadd.s32 %s49, 1
      %p53 = scmp.eq.s32.totalorder %s15, 1
      %p54 = scmp.ne.s32.totalorder %s49, %s51
      %p55 = scmp.eq.s32.totalorder %s15, 0
      %p56 = por %p54, %p55
      %p57 = scmp.ne.s32.totalorder %s49, %s51
      %p58 = scmp.eq.s32.totalorder %s20, 1
      %p59 = por %p57, %p58
      %p60 = scmp.ne.s32.totalorder %s51, %s52
      %p61 = scmp.eq.s32.totalorder %s20, 0
      %p62 = por %p60, %p61
      %p63 = scmp.ne.s32.totalorder %s51, %s52
      %p64 = scmp.eq.s32.totalorder %s21, 1
      %p65 = por %p63, %p64
      %p67 = scmp.ne.s32.totalorder %s52, %s66
      %p68 = scmp.eq.s32.totalorder %s21, 0
      %p69 = por %p67, %p68
      %s71 = sadd.s32 %s70, 1
      %p74 = scmp.eq.s32.totalorder %s15, 1
      %p75 = scmp.ne.s32.totalorder %s70, %s72
      %p76 = scmp.eq.s32.totalorder %s15, 0
      %p77 = por %p75, %p76
      %p78 = scmp.ne.s32.totalorder %s70, %s72
      %p79 = scmp.eq.s32.totalorder %s20, 1
      %p80 = por %p78, %p79
      %p81 = scmp.ne.s32.totalorder %s72, %s73
      %p82 = scmp.eq.s32.totalorder %s20, 0
      %p83 = por %p81, %p82
      %p84 = scmp.ne.s32.totalorder %s72, %s73
      %p85 = scmp.eq.s32.totalorder %s21, 1
      %p86 = por %p84, %p85
      %p88 = scmp.ne.s32.totalorder %s73, %s87
      %p89 = scmp.eq.s32.totalorder %s21, 0
      %p90 = por %p88, %p89
      %s92 = sadd.s32 %s91, 1
      %p95 = scmp.eq.s32.totalorder %s15, 1
      %p96 = scmp.ne.s32.totalorder %s91, %s93
      %p97 = scmp.eq.s32.totalorder %s15, 0
      %p98 = por %p96, %p97
      %p99 = scmp.ne.s32.totalorder %s91, %s93
      %p100 = scmp.eq.s32.totalorder %s20, 1
      %p101 = por %p99, %p100
      %p102 = scmp.ne.s32.totalorder %s93, %s94
      %p103 = scmp.eq.s32.totalorder %s20, 0
      %p104 = por %p102, %p103
      %p105 = scmp.ne.s32.totalorder %s93, %s94
      %p106 = scmp.eq.s32.totalorder %s21, 1
      %p107 = por %p105, %p106
      %p109 = scmp.ne.s32.totalorder %s94, %s108
      %p110 = scmp.eq.s32.totalorder %s21, 0
      %p111 = por %p109, %p110
      %s113 = sadd.s32 %s112, 1
      %p116 = scmp.eq.s32.totalorder %s15, 1
      %p117 = scmp.ne.s32.totalorder %s112, %s114
      %p118 = scmp.eq.s32.totalorder %s15, 0
      %p119 = por %p117, %p118
      %p120 = scmp.ne.s32.totalorder %s112, %s114
      %p121 = scmp.eq.s32.totalorder %s20, 1
      %p122 = por %p120, %p121
      %p123 = scmp.ne.s32.totalorder %s114, %s115
      %p124 = scmp.eq.s32.totalorder %s20, 0
      %p125 = por %p123, %p124
      %p126 = scmp.ne.s32.totalorder %s114, %s115
      %p127 = scmp.eq.s32.totalorder %s21, 1
      %p128 = por %p126, %p127
      %p130 = scmp.ne.s32.totalorder %s115, %s129
      %p131 = scmp.eq.s32.totalorder %s21, 0
      %p132 = por %p130, %p131
      %s134 = sadd.s32 %s133, 1
      %p137 = scmp.eq.s32.totalorder %s15, 1
      %p138 = scmp.ne.s32.totalorder %s133, %s135
      %p139 = scmp.eq.s32.totalorder %s15, 0
      %p140 = por %p138, %p139
      %p141 = scmp.ne.s32.totalorder %s133, %s135
      %p142 = scmp.eq.s32.totalorder %s20, 1
      %p143 = por %p141, %p142
      %p144 = scmp.ne.s32.totalorder %s135, %s136
      %p145 = scmp.eq.s32.totalorder %s20, 0
      %p146 = por %p144, %p145
      %p147 = scmp.ne.s32.totalorder %s135, %s136
      %p148 = scmp.eq.s32.totalorder %s21, 1
      %p149 = por %p147, %p148
      %p151 = scmp.ne.s32.totalorder %s136, %s150
      %p152 = scmp.eq.s32.totalorder %s21, 0
      %p153 = por %p151, %p152
      %s155 = sadd.s32 %s154, 1
      %p158 = scmp.eq.s32.totalorder %s15, 1
      %p159 = scmp.ne.s32.totalorder %s154, %s156
      %p160 = scmp.eq.s32.totalorder %s15, 0
      %p161 = por %p159, %p160
      %p162 = scmp.ne.s32.totalorder %s154, %s156
      %p163 = scmp.eq.s32.totalorder %s20, 1
      %p164 = por %p162, %p163
      %p165 = scmp.ne.s32.totalorder %s156, %s157
      %p166 = scmp.eq.s32.totalorder %s20, 0
      %p167 = por %p165, %p166
      %p168 = scmp.ne.s32.totalorder %s156, %s157
      %p169 = scmp.eq.s32.totalorder %s21, 1
      %p170 = por %p168, %p169
      %p172 = scmp.ne.s32.totalorder %s157, %s171
      %p173 = scmp.eq.s32.totalorder %s21, 0
      %p174 = por %p172, %p173
      %s175 = ssub.s32 %s15, %s22
      %p176 = scmp.eq.s32.totalorder %s175, 0
      %s178 = sadd.s32 %s177, 1
      %s179 = scalar_select %p176, %s177, %s178
      %p182 = pneg %p176
      %p183 = scmp.eq.s32.totalorder %s15, 1
      %p184 = por %p182, %p183
      %p185 = scmp.ne.s32.totalorder %s177, %s180
      %p186 = scmp.eq.s32.totalorder %s15, 0
      %p187 = por %p185, %p186
      %p188 = scmp.ne.s32.totalorder %s177, %s180
      %p189 = scmp.eq.s32.totalorder %s20, 1
      %p190 = por %p188, %p189
      %p191 = scmp.ne.s32.totalorder %s180, %s181
      %p192 = scmp.eq.s32.totalorder %s20, 0
      %p193 = por %p191, %p192
      %p194 = scmp.ne.s32.totalorder %s180, %s181
      %p195 = scmp.eq.s32.totalorder %s21, 1
      %p196 = por %p194, %p195
      %p198 = scmp.ne.s32.totalorder %s181, %s197
      %p199 = scmp.eq.s32.totalorder %s21, 0
      %p200 = por %p198, %p199
      %p201 = scmp.le.s32.totalorder 1, %s15
      %p202 = scmp.lt.s32.totalorder %s15, 3
      %p203 = pnand %p201, %p202
      %p204 = pneg %p203
      // Predicated region
      $region9: #{_fc_forward.1} parent=5 // pred_check
        _
      $region10: #{_fc_forward.1} parent=5 // pred_check_branch
        %206 = sbr.rel (%p203) target = $region12
      $region11: #{_fc_forward.1} parent=5 // pred_region
        %s207 = ssub.s32 %s15, 1
        // Predicated region
        $region13: #{_fc_forward.1} parent=11 // pred_check
          %p208 = pneg %p62
        $region14: #{_fc_forward.1} parent=11 // pred_check_branch
          %210 = sbr.rel (%p208) target = $region16
        $region15: #{_fc_forward.1} parent=11 // pred_region
          _
        $region16: #{_fc_forward.1} parent=11 // pred_fallthru
          _
        // Predicated region
        $region17: #{_fc_forward.1} parent=11 // pred_check
          %p211 = pneg %p83
        $region18: #{_fc_forward.1} parent=11 // pred_check_branch
          %213 = sbr.rel (%p211) target = $region20
        $region19: #{_fc_forward.1} parent=11 // pred_region
          _
        $region20: #{_fc_forward.1} parent=11 // pred_fallthru
          _
        // Predicated region
        $region21: #{_fc_forward.1} parent=11 // pred_check
          %p214 = pneg %p104
        $region22: #{_fc_forward.1} parent=11 // pred_check_branch
          %216 = sbr.rel (%p214) target = $region24
        $region23: #{_fc_forward.1} parent=11 // pred_region
          %s218 = ssub.s32 1024, 1024
          %219 = vsyncadd [#allocation3], %s218
          %s220 = sshll.u32 [#allocation2], 4
          %s221 = int_to_ptr.vmem [resolvable:$true] %s220
          %226 = dma.hbm_to_vmem [thread:$0]  %s3, 1024, %s221, [#allocation3], 64, 64, 4
        $region24: #{_fc_forward.1} parent=11 // pred_fallthru
          _
        // Predicated region
        $region25: #{_fc_forward.1} parent=11 // pred_check
          %p227 = pneg %p125
        $region26: #{_fc_forward.1} parent=11 // pred_check_branch
          %229 = sbr.rel (%p227) target = $region28
        $region27: #{_fc_forward.1} parent=11 // pred_region
          _
        $region28: #{_fc_forward.1} parent=11 // pred_fallthru
          _
        // Predicated region
        $region29: #{_fc_forward.1} parent=11 // pred_check
          %p230 = pneg %p146
        $region30: #{_fc_forward.1} parent=11 // pred_check_branch
          %232 = sbr.rel (%p230) target = $region32
        $region31: #{_fc_forward.1} parent=11 // pred_region
          %s234 = ssub.s32 1024, 1024
          %235 = vsyncadd [#allocation5], %s234
          %s236 = sshll.u32 [#allocation4], 4
          %s237 = int_to_ptr.vmem [resolvable:$true] %s236
          %242 = dma.hbm_to_vmem [thread:$0]  %s5, 1024, %s237, [#allocation5], 64, 64, 4
        $region32: #{_fc_forward.1} parent=11 // pred_fallthru
          _
        // Predicated region
        $region33: #{_fc_forward.1} parent=11 // pred_check
          %p243 = pneg %p167
        $region34: #{_fc_forward.1} parent=11 // pred_check_branch
          %245 = sbr.rel (%p243) target = $region36
        $region35: #{_fc_forward.1} parent=11 // pred_region
          _
        $region36: #{_fc_forward.1} parent=11 // pred_fallthru
          _
      $region12: #{_fc_forward.1} parent=5 // pred_fallthru
        _
      %p246 = scmp.lt.s32.totalorder %s15, 2
      // Predicated region
      $region37: #{_fc_forward.1} parent=5 // pred_check
        %p247 = pneg %p246
      $region38: #{_fc_forward.1} parent=5 // pred_check_branch
        %249 = sbr.rel (%p247) target = $region40
      $region39: #{_fc_forward.1} parent=5 // pred_region
        // Predicated region
        $region41: #{_fc_forward.1} parent=39 // pred_check
          %p250 = pneg %p35
        $region42: #{_fc_forward.1} parent=39 // pred_check_branch
          %252 = sbr.rel (%p250) target = $region44
        $region43: #{_fc_forward.1} parent=39 // pred_region
          %p253 = scmp.lt.s32.totalorder %s15, 1
          %s254 = scalar_select %p253, %s15, 1
          %s255 = smul.addr %s254, 4
          %s256 = scalar_lea.vmem %s0, %s255
        $region44: #{_fc_forward.1} parent=39 // pred_fallthru
          _
      $region40: #{_fc_forward.1} parent=5 // pred_fallthru
        _
      %p257 = scmp.le.s32.totalorder 1, %s15
      %p258 = scmp.lt.s32.totalorder %s15, 3
      %p259 = pnand %p257, %p258
      %p260 = pneg %p259
      // Predicated region
      $region45: #{_fc_forward.1} parent=5 // pred_check
        _
      $region46: #{_fc_forward.1} parent=5 // pred_check_branch
        %262 = sbr.rel (%p259) target = $region48
      $region47: #{_fc_forward.1} parent=5 // pred_region
        %s263 = ssub.s32 %s15, 1
        // Predicated region
        $region49: #{_fc_forward.1} parent=47 // pred_check
          %p264 = pneg %p104
        $region50: #{_fc_forward.1} parent=47 // pred_check_branch
          %266 = sbr.rel (%p264) target = $region52
        $region51: #{_fc_forward.1} parent=47 // pred_region
          %267 = dma.done [#allocation3], 1024
        $region52: #{_fc_forward.1} parent=47 // pred_fallthru
          _
        // Predicated region
        $region53: #{_fc_forward.1} parent=47 // pred_check
          %p268 = pneg %p146
        $region54: #{_fc_forward.1} parent=47 // pred_check_branch
          %270 = sbr.rel (%p268) target = $region56
        $region55: #{_fc_forward.1} parent=47 // pred_region
          %271 = dma.done [#allocation5], 1024
        $region56: #{_fc_forward.1} parent=47 // pred_fallthru
          _
        %p272 = scmp.lt.s32.totalorder %s20, 1
        %s273 = scalar_select %p272, %s20, 1
        %s274 = smul.addr %s273, 4
        %s275 = scalar_lea.vmem %s0, %s274
        %p276 = pneg %p41
        %p277 = pneg %p38
        %p278 = pneg %p62
        %p279 = pneg %p59
        %p280 = pneg %p83
        %p281 = pneg %p80
        %p282 = pneg %p104
        %p283 = pneg %p101
        %p284 = pneg %p125
        %p285 = pneg %p122
        %p286 = pneg %p146
        %p287 = pneg %p143
        %p288 = pneg %p167
        %p289 = pneg %p164
        %p290 = pneg %p193
        %p291 = pneg %p190
        %p292 = scmp.lt.s32.totalorder %s20, 1
        %s293 = scalar_select %p292, %s20, 1
        %s294 = smul.addr %s293, 8
        %s295 = scalar_lea.vmem %s7, %s294
        %p296 = scmp.lt.s32.totalorder %s20, 1
        %s297 = scalar_select %p296, %s20, 1
        %s298 = smul.addr %s297, 4
        %s299 = scalar_lea.vmem %s0, %s298
        %p300 = scmp.lt.s32.totalorder %s20, 1
        %s301 = scalar_select %p300, %s20, 1
        %s302 = smul.addr %s301, 8
        %s303 = scalar_lea.vmem %s7, %s302
        %v305 = vld [vmem:[%s299] sm:$0xf]
        %v306 = vld [vmem:[%s1] sm:$0xf]
        %v307 = vld [vmem:[%s1 + $0x4] sm:$0xf]
        %v308 = vld [vmem:[%s2] sm:$0x1]
        %v310 = vlaneseq
        %v311 = vshrl.u32 %v310, 7
        %v312 = vsub.s32 0, %v311
        %v313 = vrot.slane %v308, %v312
        %v317 = vunpack.c.l.b16 %v306
        %v318 = vunpack.c.l.b16 %v307
        %v319 = vpack.c.b16 %v318, %v317
        %vm321 = vcmask 130048
        %v323 = vsel %vm321, %v305, 0
        %325 = vmatprep.subr.bf16.mxu0 0
        %326 = vmatpush1.bf16.msra.mxu0 %v319
        %327 = vmatprep.subr.bf16.mxu0 0
        %328 = vmatpush1.bf16.msra.mxu0 0
        %329 = vmatprep.subr.bf16.mxu0 0
        %330 = vmatpush1.bf16.msra.mxu0 0
        %331 = vmatprep.subr.bf16.mxu0 0
        %332 = vmatpush1.bf16.msra.mxu0 0
        %333 = vmatprep.subr.bf16.mxu0 0
        %334 = vmatpush1.bf16.msra.mxu0 0
        %335 = vmatprep.subr.bf16.mxu0 0
        %336 = vmatpush1.bf16.msra.mxu0 0
        %337 = vmatprep.subr.bf16.mxu0 0
        %338 = vmatpush1.bf16.msra.mxu0 0
        %339 = vmatprep.subr.bf16.mxu0 0
        %340 = vmatpush1.bf16.msra.mxu0 0
        %341 = vmatprep.subr.bf16.mxu0 0
        %342 = vmatpush1.bf16.msra.mxu0 0
        %343 = vmatprep.subr.bf16.mxu0 0
        %344 = vmatpush1.bf16.msra.mxu0 0
        %345 = vmatprep.subr.bf16.mxu0 0
        %346 = vmatpush1.bf16.msra.mxu0 0
        %347 = vmatprep.subr.bf16.mxu0 0
        %348 = vmatpush1.bf16.msra.mxu0 0
        %349 = vmatprep.subr.bf16.mxu0 0
        %350 = vmatpush1.bf16.msra.mxu0 0
        %351 = vmatprep.subr.bf16.mxu0 0
        %352 = vmatpush1.bf16.msra.mxu0 0
        %353 = vmatprep.subr.bf16.mxu0 0
        %354 = vmatpush1.bf16.msra.mxu0 0
        %355 = vmatprep.subr.bf16.mxu0 0
        %356 = vmatpush1.bf16.msra.mxu0 0
        %357 = vmatprep.mubr.bf16.mxu0 0
        %358 = vmatmul.mubr.bf16.gmra.mrb[0].mxu0 %v323
        %v359 = vpop.f32.mrb[0].mxu0
        %v360 = vadd.f32 %v313, %v359
        %v361 = vpop.f32.mrb[0].mxu0
        %v362 = vpop.f32.mrb[0].mxu0
        %v363 = vpop.f32.mrb[0].mxu0
        %364 = vdwg.mxu0
        %v365 = vmax.f32 %v360, 0.0
        %v366 = vpack.c.bf16 %v365, %v365
        %v367 = vld [vmem:[#allocation2] sm:$0xf]
        %v368 = vld [vmem:[#allocation2 + $0x4] sm:$0xf]
        %v369 = vld [vmem:[#allocation2 + $0x8] sm:$0xf]
        %v370 = vld [vmem:[#allocation2 + $0xc] sm:$0xf]
        %v371 = vld [vmem:[#allocation2 + $0x10] sm:$0xf]
        %v372 = vld [vmem:[#allocation2 + $0x14] sm:$0xf]
        %v373 = vld [vmem:[#allocation2 + $0x18] sm:$0xf]
        %v374 = vld [vmem:[#allocation2 + $0x1c] sm:$0xf]
        %v375 = vld [vmem:[#allocation2 + $0x20] sm:$0xf]
        %v376 = vld [vmem:[#allocation2 + $0x24] sm:$0xf]
        %v377 = vld [vmem:[#allocation2 + $0x28] sm:$0xf]
        %v378 = vld [vmem:[#allocation2 + $0x2c] sm:$0xf]
        %v379 = vld [vmem:[#allocation2 + $0x30] sm:$0xf]
        %v380 = vld [vmem:[#allocation2 + $0x34] sm:$0xf]
        %v381 = vld [vmem:[#allocation2 + $0x38] sm:$0xf]
        %v382 = vld [vmem:[#allocation2 + $0x3c] sm:$0xf]
        %v383 = vld [vmem:[%s4] sm:$0x1]
        %v385 = vlaneseq
        %v386 = vshrl.u32 %v385, 7
        %v387 = vsub.s32 0, %v386
        %v388 = vrot.slane %v383, %v387
        %v406 = vunpack.c.l.b16 %v367
        %v407 = vunpack.c.l.b16 %v368
        %v408 = vunpack.c.l.b16 %v369
        %v409 = vunpack.c.l.b16 %v370
        %v410 = vunpack.c.l.b16 %v371
        %v411 = vunpack.c.l.b16 %v372
        %v412 = vunpack.c.l.b16 %v373
        %v413 = vunpack.c.l.b16 %v374
        %v414 = vunpack.c.l.b16 %v375
        %v415 = vunpack.c.l.b16 %v376
        %v416 = vunpack.c.l.b16 %v377
        %v417 = vunpack.c.l.b16 %v378
        %v418 = vunpack.c.l.b16 %v379
        %v419 = vunpack.c.l.b16 %v380
        %v420 = vunpack.c.l.b16 %v381
        %v421 = vunpack.c.l.b16 %v382
        %v422 = vpack.c.b16 %v407, %v406
        %v423 = vpack.c.b16 %v409, %v408
        %v424 = vpack.c.b16 %v411, %v410
        %v425 = vpack.c.b16 %v413, %v412
        %v426 = vpack.c.b16 %v415, %v414
        %v427 = vpack.c.b16 %v417, %v416
        %v428 = vpack.c.b16 %v419, %v418
        %v429 = vpack.c.b16 %v421, %v420
        %438 = vmatprep.subr.bf16.mxu0 0
        %439 = vmatpush1.bf16.msra.mxu0 %v422
        %440 = vmatprep.subr.bf16.mxu0 0
        %441 = vmatpush1.bf16.msra.mxu0 %v423
        %442 = vmatprep.subr.bf16.mxu0 0
        %443 = vmatpush1.bf16.msra.mxu0 %v424
        %444 = vmatprep.subr.bf16.mxu0 0
        %445 = vmatpush1.bf16.msra.mxu0 %v425
        %446 = vmatprep.subr.bf16.mxu0 0
        %447 = vmatpush1.bf16.msra.mxu0 %v426
        %448 = vmatprep.subr.bf16.mxu0 0
        %449 = vmatpush1.bf16.msra.mxu0 %v427
        %450 = vmatprep.subr.bf16.mxu0 0
        %451 = vmatpush1.bf16.msra.mxu0 %v428
        %452 = vmatprep.subr.bf16.mxu0 0
        %453 = vmatpush1.bf16.msra.mxu0 %v429
        %454 = vmatprep.subr.bf16.mxu0 0
        %455 = vmatpush1.bf16.msra.mxu0 0
        %456 = vmatprep.subr.bf16.mxu0 0
        %457 = vmatpush1.bf16.msra.mxu0 0
        %458 = vmatprep.subr.bf16.mxu0 0
        %459 = vmatpush1.bf16.msra.mxu0 0
        %460 = vmatprep.subr.bf16.mxu0 0
        %461 = vmatpush1.bf16.msra.mxu0 0
        %462 = vmatprep.subr.bf16.mxu0 0
        %463 = vmatpush1.bf16.msra.mxu0 0
        %464 = vmatprep.subr.bf16.mxu0 0
        %465 = vmatpush1.bf16.msra.mxu0 0
        %466 = vmatprep.subr.bf16.mxu0 0
        %467 = vmatpush1.bf16.msra.mxu0 0
        %468 = vmatprep.subr.bf16.mxu0 0
        %469 = vmatpush1.bf16.msra.mxu0 0
        %470 = vmatprep.mubr.bf16.mxu0 0
        %471 = vmatmul.mubr.bf16.gmra.mrb[0].mxu0 %v366
        %v472 = vpop.f32.mrb[0].mxu0
        %v473 = vadd.f32 %v388, %v472
        %v474 = vpop.f32.mrb[0].mxu0
        %v475 = vpop.f32.mrb[0].mxu0
        %v476 = vpop.f32.mrb[0].mxu0
        %477 = vdwg.mxu0
        %v478 = vmax.f32 %v473, 0.0
        %v479 = vpack.c.bf16 %v478, %v478
        %v480 = vld [vmem:[#allocation4] sm:$0xf]
        %v481 = vld [vmem:[#allocation4 + $0x4] sm:$0xf]
        %v482 = vld [vmem:[#allocation4 + $0x8] sm:$0xf]
        %v483 = vld [vmem:[#allocation4 + $0xc] sm:$0xf]
        %v484 = vld [vmem:[#allocation4 + $0x10] sm:$0xf]
        %v485 = vld [vmem:[#allocation4 + $0x14] sm:$0xf]
        %v486 = vld [vmem:[#allocation4 + $0x18] sm:$0xf]
        %v487 = vld [vmem:[#allocation4 + $0x1c] sm:$0xf]
        %v488 = vld [vmem:[#allocation4 + $0x20] sm:$0xf]
        %v489 = vld [vmem:[#allocation4 + $0x24] sm:$0xf]
        %v490 = vld [vmem:[#allocation4 + $0x28] sm:$0xf]
        %v491 = vld [vmem:[#allocation4 + $0x2c] sm:$0xf]
        %v492 = vld [vmem:[#allocation4 + $0x30] sm:$0xf]
        %v493 = vld [vmem:[#allocation4 + $0x34] sm:$0xf]
        %v494 = vld [vmem:[#allocation4 + $0x38] sm:$0xf]
        %v495 = vld [vmem:[#allocation4 + $0x3c] sm:$0xf]
        %v496 = vld [vmem:[%s6] sm:$0x1]
        %v498 = vlaneseq
        %v499 = vshrl.u32 %v498, 7
        %v500 = vsub.s32 0, %v499
        %v501 = vrot.slane %v496, %v500
        %v519 = vunpack.c.l.b16 %v480
        %v520 = vunpack.c.l.b16 %v481
        %v521 = vunpack.c.l.b16 %v482
        %v522 = vunpack.c.l.b16 %v483
        %v523 = vunpack.c.l.b16 %v484
        %v524 = vunpack.c.l.b16 %v485
        %v525 = vunpack.c.l.b16 %v486
        %v526 = vunpack.c.l.b16 %v487
        %v527 = vunpack.c.l.b16 %v488
        %v528 = vunpack.c.l.b16 %v489
        %v529 = vunpack.c.l.b16 %v490
        %v530 = vunpack.c.l.b16 %v491
        %v531 = vunpack.c.l.b16 %v492
        %v532 = vunpack.c.l.b16 %v493
        %v533 = vunpack.c.l.b16 %v494
        %v534 = vunpack.c.l.b16 %v495
        %v535 = vpack.c.b16 %v520, %v519
        %v536 = vpack.c.b16 %v522, %v521
        %v537 = vpack.c.b16 %v524, %v523
        %v538 = vpack.c.b16 %v526, %v525
        %v539 = vpack.c.b16 %v528, %v527
        %v540 = vpack.c.b16 %v530, %v529
        %v541 = vpack.c.b16 %v532, %v531
        %v542 = vpack.c.b16 %v534, %v533
        %551 = vmatprep.subr.bf16.mxu0 0
        %552 = vmatpush1.bf16.msra.mxu0 %v535
        %553 = vmatprep.subr.bf16.mxu0 0
        %554 = vmatpush1.bf16.msra.mxu0 %v536
        %555 = vmatprep.subr.bf16.mxu0 0
        %556 = vmatpush1.bf16.msra.mxu0 %v537
        %557 = vmatprep.subr.bf16.mxu0 0
        %558 = vmatpush1.bf16.msra.mxu0 %v538
        %559 = vmatprep.subr.bf16.mxu0 0
        %560 = vmatpush1.bf16.msra.mxu0 %v539
        %561 = vmatprep.subr.bf16.mxu0 0
        %562 = vmatpush1.bf16.msra.mxu0 %v540
        %563 = vmatprep.subr.bf16.mxu0 0
        %564 = vmatpush1.bf16.msra.mxu0 %v541
        %565 = vmatprep.subr.bf16.mxu0 0
        %566 = vmatpush1.bf16.msra.mxu0 %v542
        %567 = vmatprep.subr.bf16.mxu0 0
        %568 = vmatpush1.bf16.msra.mxu0 0
        %569 = vmatprep.subr.bf16.mxu0 0
        %570 = vmatpush1.bf16.msra.mxu0 0
        %571 = vmatprep.subr.bf16.mxu0 0
        %572 = vmatpush1.bf16.msra.mxu0 0
        %573 = vmatprep.subr.bf16.mxu0 0
        %574 = vmatpush1.bf16.msra.mxu0 0
        %575 = vmatprep.subr.bf16.mxu0 0
        %576 = vmatpush1.bf16.msra.mxu0 0
        %577 = vmatprep.subr.bf16.mxu0 0
        %578 = vmatpush1.bf16.msra.mxu0 0
        %579 = vmatprep.subr.bf16.mxu0 0
        %580 = vmatpush1.bf16.msra.mxu0 0
        %581 = vmatprep.subr.bf16.mxu0 0
        %582 = vmatpush1.bf16.msra.mxu0 0
        %583 = vmatprep.mubr.bf16.mxu0 0
        %584 = vmatmul.mubr.bf16.gmra.mrb[0].mxu0 %v479
        %v585 = vpop.f32.mrb[0].mxu0
        %v586 = vadd.f32 %v501, %v585
        %v587 = vpop.f32.mrb[0].mxu0
        %v588 = vpop.f32.mrb[0].mxu0
        %v589 = vpop.f32.mrb[0].mxu0
        %590 = vdwg.mxu0
        %591 = vst [vmem:[%s303] sm:$0xff] %v586
        %p592 = scmp.lt.s32.totalorder %s20, 1
        %s593 = scalar_select %p592, %s20, 1
        %s594 = smul.addr %s593, 8
        %s595 = scalar_lea.vmem %s7, %s594
        // Predicated region
        $region57: #{_fc_forward.1} parent=47 // pred_check
          %p596 = pneg %p190
        $region58: #{_fc_forward.1} parent=47 // pred_check_branch
          %598 = sbr.rel (%p596) target = $region60
        $region59: #{_fc_forward.1} parent=47 // pred_region
          _
        $region60: #{_fc_forward.1} parent=47 // pred_fallthru
          _
      $region48: #{_fc_forward.1} parent=5 // pred_fallthru
        _
      %p599 = scmp.le.s32.totalorder 2, %s15
      // Predicated region
      $region61: #{_fc_forward.1} parent=5 // pred_check
        %p600 = pneg %p599
      $region62: #{_fc_forward.1} parent=5 // pred_check_branch
        %602 = sbr.rel (%p600) target = $region64
      $region63: #{_fc_forward.1} parent=5 // pred_region
        %s603 = ssub.s32 %s15, 2
        // Predicated region
        $region65: #{_fc_forward.1} parent=63 // pred_check
          %p604 = pneg %p196
        $region66: #{_fc_forward.1} parent=63 // pred_check_branch
          %606 = sbr.rel (%p604) target = $region68
        $region67: #{_fc_forward.1} parent=63 // pred_region
          %p607 = scmp.lt.s32.totalorder %s21, 1
          %s608 = scalar_select %p607, %s21, 1
          %s609 = smul.addr %s608, 8
          %s610 = scalar_lea.vmem %s7, %s609
        $region68: #{_fc_forward.1} parent=63 // pred_fallthru
          _
      $region64: #{_fc_forward.1} parent=5 // pred_fallthru
        _
    $region6: #{_fc_forward.1} parent=1 // loop_footer
      %s19 = sadd.s32 1, %s15
    $region7: #{_fc_forward.1} parent=1 // loop_footer_branch
      %14 = sbr.rel target = $region3
    $region8: #{_fc_forward.1} parent=1 // loop_exit
      _
    %611 = vsyncpa [#allocation3], 1
    %s612 = scalar_lea.sflag [#allocation3], 1
    %613 = vsyncpa %s612, 1
    %614 = vsyncpa [#allocation5], 1

</llo_original>
